<compile_context>
chip_gen: v5e
topology: v5e:2x2
jax: 0.10.0
libtpu: 0.0.40
codegen_flags: <defaults>
</compile_context>

<pallas_src>
import functools

import jax
import jax.numpy as jnp
from jax.experimental import pallas as pl
from jax.experimental.pallas import tpu as pltpu

NFB = 512       # input feature half-width -> x has 2*NFB = 1024 features
NDIM = 256
NMID = 64
NOUT = 2
NOUT_PAD = 128  # lane-dense padded output width
LN_EPS = 1e-5   # PyTorch nn.LayerNorm default


def _round_up(a, m):
    return (a + m - 1) // m * m


def _mlp_kernel(seed_ref,
                x_ref, w1_ref, b1_ref, w2_ref, b2_ref,
                g_ref, beta_ref, w3_ref, b3_ref,
                o_ref,
                *, tb, p_drop, drop_threshold, apply_dropout):
    # fc_action_node + ReLU   (bf16 operands, f32 accumulation on the MXU)
    x = x_ref[...].astype(jnp.bfloat16)                                 # (tb, 1024)
    h = jnp.dot(x, w1_ref[...], preferred_element_type=jnp.float32)     # (tb, 256)
    h = jnp.maximum(h + b1_ref[...], 0.0)

    # fc_action_mid
    m = jnp.dot(h.astype(jnp.bfloat16), w2_ref[...],
                preferred_element_type=jnp.float32)                     # (tb, 64)
    m = m + b2_ref[...]

    # LayerNorm([NMID])  (biased variance, like PyTorch; all f32)
    mean = jnp.mean(m, axis=-1, keepdims=True)
    cent = m - mean
    var = jnp.mean(cent * cent, axis=-1, keepdims=True)
    m = cent * jax.lax.rsqrt(var + LN_EPS)
    m = m * g_ref[...] + beta_ref[...]

    # ReLU + fc_action_final  (w3/b3 zero-padded to 128 lanes -> lane-dense store)
    m = jnp.maximum(m, 0.0)
    out = jnp.dot(m.astype(jnp.bfloat16), w3_ref[...],
                  preferred_element_type=jnp.float32)                   # (tb, 128)
    out = out + b3_ref[...]

    if apply_dropout:
        # Inverted dropout matching nn.Dropout(p) semantics (zero w.p. p,
        # scale kept by 1/(1-p)) via a stateless hash of (seed, element id).
        rows = jax.lax.broadcasted_iota(jnp.int32, out.shape, 0)
        cols = jax.lax.broadcasted_iota(jnp.int32, out.shape, 1)
        gid = ((pl.program_id(0) * tb + rows) * out.shape[1] + cols)
        h32 = gid.astype(jnp.uint32)
        h32 = h32 ^ (seed_ref[0].astype(jnp.uint32) * jnp.uint32(0x9E3779B9))
        # lowbias32 integer mix
        h32 = h32 ^ (h32 >> 16)
        h32 = h32 * jnp.uint32(0x7FEB352D)
        h32 = h32 ^ (h32 >> 15)
        h32 = h32 * jnp.uint32(0x846CA68B)
        h32 = h32 ^ (h32 >> 16)
        keep = h32 >= jnp.uint32(drop_threshold)   # raw u32 vs u32 threshold
        out = jnp.where(keep, out * jnp.float32(1.0 / (1.0 - p_drop)), 0.0)

    o_ref[...] = out.astype(o_ref.dtype)


def baseline_interaction_vision2(x, params, *, mode="train", p_drop=0.1,
                                 seed=0, tb=None):
    """Forward pass of BaselineInteractionVision2.

    x: (B, 2*NFB).  Returns (B, 2) float32.
    """
    B, F = x.shape
    assert F == 2 * NFB
    w1, b1, w2, b2, gamma, beta, w3, b3 = params

    # Batch tile: single grid step up to 256 rows, 256-row tiles beyond that.
    if tb is None:
        tb = min(256, _round_up(B, 8))
    B_pad = _round_up(B, tb)
    if B_pad != B:
        x = jnp.pad(x, ((0, B_pad - B), (0, 0)))

    # Lane-dense output: pad the final layer to 128 output lanes (zeros).
    w3p = jnp.pad(w3, ((0, 0), (0, NOUT_PAD - NOUT)))
    b3p = jnp.pad(b3, ((0, 0), (0, NOUT_PAD - NOUT)))

    seed_arr = jnp.array([seed], dtype=jnp.int32)
    apply_dropout = (mode == "train") and p_drop > 0.0
    drop_threshold = min(int(round(p_drop * (1 << 32))), (1 << 32) - 1)

    kernel = functools.partial(_mlp_kernel, tb=tb, p_drop=p_drop,
                               drop_threshold=drop_threshold,
                               apply_dropout=apply_dropout)

    full = lambda i, s: (0, 0)     # replicated (whole-array) blocks
    rows = lambda i, s: (i, 0)     # batch-tiled blocks

    out = pl.pallas_call(
        kernel,
        out_shape=jax.ShapeDtypeStruct((B_pad, NOUT_PAD), jnp.float32),
        grid_spec=pltpu.PrefetchScalarGridSpec(
            num_scalar_prefetch=1,
            grid=(B_pad // tb,),
            in_specs=[
                pl.BlockSpec((tb, 2 * NFB), rows),       # x
                pl.BlockSpec((2 * NFB, NDIM), full),     # w1 (bf16)
                pl.BlockSpec((1, NDIM), full),           # b1
                pl.BlockSpec((NDIM, NMID), full),        # w2 (bf16)
                pl.BlockSpec((1, NMID), full),           # b2
                pl.BlockSpec((1, NMID), full),           # gamma
                pl.BlockSpec((1, NMID), full),           # beta
                pl.BlockSpec((NMID, NOUT_PAD), full),    # w3 padded (bf16)
                pl.BlockSpec((1, NOUT_PAD), full),       # b3 padded
            ],
            out_specs=pl.BlockSpec((tb, NOUT_PAD), rows),
        ),
        compiler_params=pltpu.CompilerParams(
            # Grid steps are independent (stateless dropout hash) -> shard
            # across both TensorCores on v7x; neutral on v5e/v6e.
            dimension_semantics=("parallel",),
        ),
    )(seed_arr, x, w1, b1, w2, b2, gamma, beta, w3p, b3p)

    return out[:B, :NOUT]


def init_params(key):
    """Deterministic param init mirroring the PyTorch __init__.

    nn.Linear weights get kaiming_normal_ (fan_in, gain sqrt(2)); biases keep
    PyTorch's default uniform(-1/sqrt(fan_in), 1/sqrt(fan_in)).  LayerNorm:
    gamma = ones, beta = zeros.  Weights are returned transposed as (in, out)
    and pre-cast to bf16 for the MXU; biases / LN params stay f32.
    """
    ks = jax.random.split(key, 6)

    def kaiming(k, fan_in, fan_out):
        std = (2.0 / fan_in) ** 0.5
        # torch weight is (out, in); we store the transpose (in, out).
        w = (jax.random.normal(k, (fan_out, fan_in), jnp.float32) * std).T
        return w.astype(jnp.bfloat16)

    def bias(k, fan_in, fan_out):
        bound = 1.0 / (fan_in ** 0.5)
        return jax.random.uniform(k, (1, fan_out), jnp.float32, -bound, bound)

    w1 = kaiming(ks[0], 2 * NFB, NDIM)
    b1 = bias(ks[1], 2 * NFB, NDIM)
    w2 = kaiming(ks[2], NDIM, NMID)
    b2 = bias(ks[3], NDIM, NMID)
    gamma = jnp.ones((1, NMID), jnp.float32)
    beta = jnp.zeros((1, NMID), jnp.float32)
    w3 = kaiming(ks[4], NMID, NOUT)
    b3 = bias(ks[5], NMID, NOUT)
    return (w1, b1, w2, b2, gamma, beta, w3, b3)


def _reference(x, params):
    """Pure-JAX f32 reference (eval mode, no dropout)."""
    w1, b1, w2, b2, gamma, beta, w3, b3 = params
    w1 = w1.astype(jnp.float32)
    w2 = w2.astype(jnp.float32)
    w3 = w3.astype(jnp.float32)
    h = jax.nn.relu(x @ w1 + b1)
    m = h @ w2 + b2
    mean = jnp.mean(m, axis=-1, keepdims=True)
    var = jnp.mean((m - mean) ** 2, axis=-1, keepdims=True)
    m = (m - mean) / jnp.sqrt(var + LN_EPS) * gamma + beta
    m = jax.nn.relu(m)
    return m @ w3 + b3


if __name__ == "__main__":
    key = jax.random.PRNGKey(0)
    pkey, xkey = jax.random.split(key)
    params = init_params(pkey)

    B = 16                                   # small batch; features fixed by module
    x = jax.random.normal(xkey, (B, 2 * NFB), jnp.float32)

    # Eval mode (deterministic) -- check against pure-JAX f32 reference.
    # bf16 matmul operands with f32 accumulation -> loose-ish tolerance.
    out_eval = baseline_interaction_vision2(x, params, mode="eval")
    out_eval = jax.block_until_ready(out_eval)
    ref = _reference(x, params)
    assert out_eval.shape == (B, NOUT)
    assert jnp.allclose(out_eval, ref, atol=5e-2, rtol=5e-2), "mismatch vs reference"

    # Train mode: stateless hash-based dropout (same Bernoulli(1-p)/scale
    # semantics as nn.Dropout, different RNG stream than torch).
    p = 0.1
    out_train = baseline_interaction_vision2(x, params, mode="train",
                                             p_drop=p, seed=123)
    out_train = jax.block_until_ready(out_train)
    assert out_train.shape == (B, NOUT)
    dropped = out_train == 0.0
    kept_ok = jnp.isclose(out_train, out_eval * (1.0 / (1.0 - p)),
                          atol=1e-4, rtol=1e-4)
    assert bool(jnp.all(dropped | kept_ok)), "dropout values inconsistent"

    print("KERNEL_OK")
</pallas_src>

<mosaic_0001>
module attributes {stable_mosaic.version = 11 : i64} {
  func.func @_mlp_kernel(%arg0: i32, %arg1: memref<1xi32, #tpu.memory_space<smem>>, %arg2: memref<16x1024xf32, #tpu.memory_space<vmem>>, %arg3: memref<1024x256xbf16, #tpu.memory_space<vmem>>, %arg4: memref<1x256xf32, #tpu.memory_space<vmem>>, %arg5: memref<256x64xbf16, #tpu.memory_space<vmem>>, %arg6: memref<1x64xf32, #tpu.memory_space<vmem>>, %arg7: memref<1x64xf32, #tpu.memory_space<vmem>>, %arg8: memref<1x64xf32, #tpu.memory_space<vmem>>, %arg9: memref<64x128xbf16, #tpu.memory_space<vmem>>, %arg10: memref<1x128xf32, #tpu.memory_space<vmem>>, %arg11: memref<16x128xf32, #tpu.memory_space<vmem>>) attributes {dimension_semantics = [#tpu.dimension_semantics<parallel>], iteration_bounds = array<i64: 1>, scalar_prefetch = 1 : i64, scratch_operands = 0 : i64, tpu.core_type = #tpu.core_type<tc>, window_params = [{transform_indices = @transform_0, window_bounds = array<i64: 16, 1024>}, {pipeline_mode = #tpu.pipeline_mode<synchronous>, transform_indices = @transform_1, window_bounds = array<i64: 1024, 256>}, {pipeline_mode = #tpu.pipeline_mode<synchronous>, transform_indices = @transform_2, window_bounds = array<i64: 1, 256>}, {pipeline_mode = #tpu.pipeline_mode<synchronous>, transform_indices = @transform_3, window_bounds = array<i64: 256, 64>}, {pipeline_mode = #tpu.pipeline_mode<synchronous>, transform_indices = @transform_4, window_bounds = array<i64: 1, 64>}, {pipeline_mode = #tpu.pipeline_mode<synchronous>, transform_indices = @transform_5, window_bounds = array<i64: 1, 64>}, {pipeline_mode = #tpu.pipeline_mode<synchronous>, transform_indices = @transform_6, window_bounds = array<i64: 1, 64>}, {pipeline_mode = #tpu.pipeline_mode<synchronous>, transform_indices = @transform_7, window_bounds = array<i64: 64, 128>}, {pipeline_mode = #tpu.pipeline_mode<synchronous>, transform_indices = @transform_8, window_bounds = array<i64: 1, 128>}, {transform_indices = @transform_9, window_bounds = array<i64: 16, 128>}]} {
    %c0 = arith.constant 0 : index
    %c0_0 = arith.constant 0 : index
    %0 = vector.load %arg2[%c0, %c0_0] : memref<16x1024xf32, #tpu.memory_space<vmem>>, vector<16x1024xf32>
    %1 = arith.truncf %0 : vector<16x1024xf32> to vector<16x1024xbf16>
    %c0_1 = arith.constant 0 : index
    %c0_2 = arith.constant 0 : index
    %2 = vector.load %arg3[%c0_1, %c0_2] : memref<1024x256xbf16, #tpu.memory_space<vmem>>, vector<1024x256xbf16>
    %cst = arith.constant dense<0.000000e+00> : vector<16x256xf32>
    %3 = tpu.matmul %1, %2, %cst {dimension_numbers = #tpu.dot_dimension_numbers<[1], [0], [0], [1], [0, 0, 1, 1], [], []>} : vector<16x1024xbf16>, vector<1024x256xbf16>, vector<16x256xf32> -> vector<16x256xf32>
    %c0_3 = arith.constant 0 : index
    %c0_4 = arith.constant 0 : index
    %4 = vector.load %arg4[%c0_3, %c0_4] : memref<1x256xf32, #tpu.memory_space<vmem>>, vector<1x256xf32>
    %5 = vector.broadcast %4 : vector<1x256xf32> to vector<16x256xf32>
    %6 = arith.addf %3, %5 : vector<16x256xf32>
    %cst_5 = arith.constant 0.000000e+00 : f32
    %7 = vector.broadcast %cst_5 : f32 to vector<16x256xf32>
    %8 = arith.maximumf %6, %7 : vector<16x256xf32>
    %9 = arith.truncf %8 : vector<16x256xf32> to vector<16x256xbf16>
    %c0_6 = arith.constant 0 : index
    %c0_7 = arith.constant 0 : index
    %10 = vector.load %arg5[%c0_6, %c0_7] : memref<256x64xbf16, #tpu.memory_space<vmem>>, vector<256x64xbf16>
    %cst_8 = arith.constant dense<0.000000e+00> : vector<16x64xf32>
    %11 = tpu.matmul %9, %10, %cst_8 {dimension_numbers = #tpu.dot_dimension_numbers<[1], [0], [0], [1], [0, 0, 1, 1], [], []>} : vector<16x256xbf16>, vector<256x64xbf16>, vector<16x64xf32> -> vector<16x64xf32>
    %c0_9 = arith.constant 0 : index
    %c0_10 = arith.constant 0 : index
    %12 = vector.load %arg6[%c0_9, %c0_10] : memref<1x64xf32, #tpu.memory_space<vmem>>, vector<1x64xf32>
    %13 = vector.broadcast %12 : vector<1x64xf32> to vector<16x64xf32>
    %14 = arith.addf %11, %13 : vector<16x64xf32>
    %cst_11 = arith.constant dense<0.000000e+00> : vector<16xf32>
    %15 = vector.multi_reduction <add>, %14, %cst_11 [1] : vector<16x64xf32> to vector<16xf32>
    %16 = vector.shape_cast %15 : vector<16xf32> to vector<16x1xf32>
    %cst_12 = arith.constant 6.400000e+01 : f32
    %17 = vector.broadcast %cst_12 : f32 to vector<16x1xf32>
    %18 = arith.divf %16, %17 : vector<16x1xf32>
    %19 = vector.broadcast %18 : vector<16x1xf32> to vector<16x64xf32>
    %20 = arith.subf %14, %19 : vector<16x64xf32>
    %21 = arith.mulf %20, %20 : vector<16x64xf32>
    %cst_13 = arith.constant dense<0.000000e+00> : vector<16xf32>
    %22 = vector.multi_reduction <add>, %21, %cst_13 [1] : vector<16x64xf32> to vector<16xf32>
    %23 = vector.shape_cast %22 : vector<16xf32> to vector<16x1xf32>
    %cst_14 = arith.constant 6.400000e+01 : f32
    %24 = vector.broadcast %cst_14 : f32 to vector<16x1xf32>
    %25 = arith.divf %23, %24 : vector<16x1xf32>
    %cst_15 = arith.constant 9.99999974E-6 : f32
    %26 = vector.broadcast %cst_15 : f32 to vector<16x1xf32>
    %27 = arith.addf %25, %26 : vector<16x1xf32>
    %28 = math.rsqrt %27 : vector<16x1xf32>
    %29 = vector.broadcast %28 : vector<16x1xf32> to vector<16x64xf32>
    %30 = arith.mulf %20, %29 : vector<16x64xf32>
    %c0_16 = arith.constant 0 : index
    %c0_17 = arith.constant 0 : index
    %31 = vector.load %arg7[%c0_16, %c0_17] : memref<1x64xf32, #tpu.memory_space<vmem>>, vector<1x64xf32>
    %32 = vector.broadcast %31 : vector<1x64xf32> to vector<16x64xf32>
    %33 = arith.mulf %30, %32 : vector<16x64xf32>
    %c0_18 = arith.constant 0 : index
    %c0_19 = arith.constant 0 : index
    %34 = vector.load %arg8[%c0_18, %c0_19] : memref<1x64xf32, #tpu.memory_space<vmem>>, vector<1x64xf32>
    %35 = vector.broadcast %34 : vector<1x64xf32> to vector<16x64xf32>
    %36 = arith.addf %33, %35 : vector<16x64xf32>
    %cst_20 = arith.constant 0.000000e+00 : f32
    %37 = vector.broadcast %cst_20 : f32 to vector<16x64xf32>
    %38 = arith.maximumf %36, %37 : vector<16x64xf32>
    %39 = arith.truncf %38 : vector<16x64xf32> to vector<16x64xbf16>
    %c0_21 = arith.constant 0 : index
    %c0_22 = arith.constant 0 : index
    %40 = vector.load %arg9[%c0_21, %c0_22] : memref<64x128xbf16, #tpu.memory_space<vmem>>, vector<64x128xbf16>
    %cst_23 = arith.constant dense<0.000000e+00> : vector<16x128xf32>
    %41 = tpu.matmul %39, %40, %cst_23 {dimension_numbers = #tpu.dot_dimension_numbers<[1], [0], [0], [1], [0, 0, 1, 1], [], []>} : vector<16x64xbf16>, vector<64x128xbf16>, vector<16x128xf32> -> vector<16x128xf32>
    %c0_24 = arith.constant 0 : index
    %c0_25 = arith.constant 0 : index
    %42 = vector.load %arg10[%c0_24, %c0_25] : memref<1x128xf32, #tpu.memory_space<vmem>>, vector<1x128xf32>
    %43 = vector.broadcast %42 : vector<1x128xf32> to vector<16x128xf32>
    %44 = arith.addf %41, %43 : vector<16x128xf32>
    %c0_26 = arith.constant 0 : index
    %c0_27 = arith.constant 0 : index
    %45 = vector.load %arg11[%c0_26, %c0_27] : memref<16x128xf32, #tpu.memory_space<vmem>>, vector<16x128xf32>
    tpu.vector_store %arg11[%c0_26, %c0_27], %44 {strides = array<i32>} : memref<16x128xf32, #tpu.memory_space<vmem>>, vector<16x128xf32>,
    return
  }
  func.func @transform_0(%arg0: i32, %arg1: memref<1xi32, #tpu.memory_space<smem>>) -> (i32, i32) {
    %c0_i32 = arith.constant 0 : i32
    %c0_i32_0 = arith.constant 0 : i32
    return %arg0, %c0_i32 : i32, i32
  }
  func.func @transform_1(%arg0: i32, %arg1: memref<1xi32, #tpu.memory_space<smem>>) -> (i32, i32) {
    %c0_i32 = arith.constant 0 : i32
    %c0_i32_0 = arith.constant 0 : i32
    %c0_i32_1 = arith.constant 0 : i32
    return %c0_i32, %c0_i32_0 : i32, i32
  }
  func.func @transform_2(%arg0: i32, %arg1: memref<1xi32, #tpu.memory_space<smem>>) -> (i32, i32) {
    %c0_i32 = arith.constant 0 : i32
    %c0_i32_0 = arith.constant 0 : i32
    %c0_i32_1 = arith.constant 0 : i32
    return %c0_i32, %c0_i32_0 : i32, i32
  }
  func.func @transform_3(%arg0: i32, %arg1: memref<1xi32, #tpu.memory_space<smem>>) -> (i32, i32) {
    %c0_i32 = arith.constant 0 : i32
    %c0_i32_0 = arith.constant 0 : i32
    %c0_i32_1 = arith.constant 0 : i32
    return %c0_i32, %c0_i32_0 : i32, i32
  }
  func.func @transform_4(%arg0: i32, %arg1: memref<1xi32, #tpu.memory_space<smem>>) -> (i32, i32) {
    %c0_i32 = arith.constant 0 : i32
    %c0_i32_0 = arith.constant 0 : i32
    %c0_i32_1 = arith.constant 0 : i32
    return %c0_i32, %c0_i32_0 : i32, i32
  }
  func.func @transform_5(%arg0: i32, %arg1: memref<1xi32, #tpu.memory_space<smem>>) -> (i32, i32) {
    %c0_i32 = arith.constant 0 : i32
    %c0_i32_0 = arith.constant 0 : i32
    %c0_i32_1 = arith.constant 0 : i32
    return %c0_i32, %c0_i32_0 : i32, i32
  }
  func.func @transform_6(%arg0: i32, %arg1: memref<1xi32, #tpu.memory_space<smem>>) -> (i32, i32) {
    %c0_i32 = arith.constant 0 : i32
    %c0_i32_0 = arith.constant 0 : i32
    %c0_i32_1 = arith.constant 0 : i32
    return %c0_i32, %c0_i32_0 : i32, i32
  }
  func.func @transform_7(%arg0: i32, %arg1: memref<1xi32, #tpu.memory_space<smem>>) -> (i32, i32) {
    %c0_i32 = arith.constant 0 : i32
    %c0_i32_0 = arith.constant 0 : i32
    %c0_i32_1 = arith.constant 0 : i32
    return %c0_i32, %c0_i32_0 : i32, i32
  }
  func.func @transform_8(%arg0: i32, %arg1: memref<1xi32, #tpu.memory_space<smem>>) -> (i32, i32) {
    %c0_i32 = arith.constant 0 : i32
    %c0_i32_0 = arith.constant 0 : i32
    %c0_i32_1 = arith.constant 0 : i32
    return %c0_i32, %c0_i32_0 : i32, i32
  }
  func.func @transform_9(%arg0: i32, %arg1: memref<1xi32, #tpu.memory_space<smem>>) -> (i32, i32) {
    %c0_i32 = arith.constant 0 : i32
    %c0_i32_0 = arith.constant 0 : i32
    return %arg0, %c0_i32 : i32, i32
  }
}

</mosaic_0001>

<llo_original>
// kernel: tpu_custom_call.1
$region0: #{tpu_custom_call.1}
  #allocation0 [shape = 'u32[]', space=smem, size = 0x4, offset = 0x4, fixed_abs, tag = 'smem constant byte address 0x4 - core index']
  #allocation1 [shape = 'u32[72,128]{1,0:T(1,128)}', space=vmem, size = 0x9000, scoped, tag = 'internal scratch']
  #allocation2 [shape = 's32[1]{0}', space=sflag, size = 0x4, scoped, tag = 'scoped memory for tpu_custom_call.1']
  #allocation3 [shape = 's32[1]{0:T(128)S(6)}', space=smem, size = 0x200, scoped, tag = 'prefetched SMEM operand 0']
  %s0 = inlined_call_operand.<no memory space> [shape: s32[1], index: 0, kind: input, shape index: {}]
  %s1 = inlined_call_operand.vmem [shape: f32[16,1024], index: 1, kind: input, shape index: {}]
  %s2 = inlined_call_operand.hbm [shape: bf16[1024,256], index: 2, kind: input, shape index: {}]
  %s3 = inlined_call_operand.vmem [shape: f32[1,256], index: 3, kind: input, shape index: {}]
  %s4 = inlined_call_operand.vmem [shape: bf16[256,64], index: 4, kind: input, shape index: {}]
  %s5 = inlined_call_operand.vmem [shape: f32[1,64], index: 5, kind: input, shape index: {}]
  %s6 = inlined_call_operand.vmem [shape: f32[1,64], index: 6, kind: input, shape index: {}]
  %s7 = inlined_call_operand.vmem [shape: f32[1,64], index: 7, kind: input, shape index: {}]
  %s8 = inlined_call_operand.vmem [shape: bf16[64,128], index: 8, kind: input, shape index: {}]
  %s9 = inlined_call_operand.vmem [shape: f32[1,128], index: 9, kind: input, shape index: {}]
  %s10 = inlined_call_operand.hbm [shape: f32[16,128], index: 10, kind: output, shape index: {}]
  %s11 = sld [smem:[#allocation0]]
  $region50: #{tpu_custom_call.1} parent=0
    _
  %s13 = ssub.s32 1, %s11
  %s14 = scalar_select 0, %s13, %s11
  %15 = sst [smem:[#allocation3]] %s0
  $region1: #{tpu_custom_call.1} parent=0
    #allocation4 [shape = 'u8[524288]{0}', space=vmem, size = 0x80000, scoped, tag = 'input window, operand 2, single buffered']
    #allocation5 [shape = 's32[1]{0}', space=sflag, size = 0x4, scoped, tag = 'scoped memory for tpu_custom_call.1']
    #allocation6 [shape = 's32[1]{0}', space=sflag, size = 0x4, scoped, tag = 'scoped memory for tpu_custom_call.1']
    #allocation7 [shape = 'u8[8192]{0}', space=vmem, size = 0x2000, scoped, tag = 'output window, operand 0, single buffered']
    %16 = vsyncpa [#allocation5], 0
    %17 = vsyncpa [#allocation6], 0
    // Predicated region
    $region2: #{tpu_custom_call.1} parent=1 // pred_check
      _
    $region3: #{tpu_custom_call.1} parent=1 // pred_check_branch
      %19 = sbr.rel (0) target = $region5
    $region4: #{tpu_custom_call.1} parent=1 // pred_region
      _
    $region5: #{tpu_custom_call.1} parent=1 // pred_fallthru
      _
    // Predicated region
    $region6: #{tpu_custom_call.1} parent=1 // pred_check
      _
    $region7: #{tpu_custom_call.1} parent=1 // pred_check_branch
      %21 = sbr.rel (0) target = $region9
    $region8: #{tpu_custom_call.1} parent=1 // pred_region
      %23 = vsyncadd [#allocation5], 0
      %s24 = sshll.u32 %s2, 4
      %s25 = int_to_ptr.hbm [resolvable:$true] %s24
      %s26 = sshll.u32 [#allocation4], 4
      %s27 = int_to_ptr.vmem [resolvable:$true] %s26
      %32 = dma.hbm_to_vmem [thread:$0]  %s25, 16384, %s27, [#allocation5], 128, 128, 8
    $region9: #{tpu_custom_call.1} parent=1 // pred_fallthru
      _
    // Predicated region
    $region10: #{tpu_custom_call.1} parent=1 // pred_check
      _
    $region11: #{tpu_custom_call.1} parent=1 // pred_check_branch
      %34 = sbr.rel (0) target = $region13
    $region12: #{tpu_custom_call.1} parent=1 // pred_region
      _
    $region13: #{tpu_custom_call.1} parent=1 // pred_fallthru
      _
    // Predicated region
    $region14: #{tpu_custom_call.1} parent=1 // pred_check
      _
    $region15: #{tpu_custom_call.1} parent=1 // pred_check_branch
      %36 = sbr.rel (0) target = $region17
    $region16: #{tpu_custom_call.1} parent=1 // pred_region
      _
    $region17: #{tpu_custom_call.1} parent=1 // pred_fallthru
      _
    // Predicated region
    $region18: #{tpu_custom_call.1} parent=1 // pred_check
      _
    $region19: #{tpu_custom_call.1} parent=1 // pred_check_branch
      %38 = sbr.rel (0) target = $region21
    $region20: #{tpu_custom_call.1} parent=1 // pred_region
      _
    $region21: #{tpu_custom_call.1} parent=1 // pred_fallthru
      _
    // Predicated region
    $region22: #{tpu_custom_call.1} parent=1 // pred_check
      _
    $region23: #{tpu_custom_call.1} parent=1 // pred_check_branch
      %40 = sbr.rel (0) target = $region25
    $region24: #{tpu_custom_call.1} parent=1 // pred_region
      _
    $region25: #{tpu_custom_call.1} parent=1 // pred_fallthru
      _
    // Predicated region
    $region26: #{tpu_custom_call.1} parent=1 // pred_check
      _
    $region27: #{tpu_custom_call.1} parent=1 // pred_check_branch
      %42 = sbr.rel (0) target = $region29
    $region28: #{tpu_custom_call.1} parent=1 // pred_region
      _
    $region29: #{tpu_custom_call.1} parent=1 // pred_fallthru
      _
    // Predicated region
    $region30: #{tpu_custom_call.1} parent=1 // pred_check
      _
    $region31: #{tpu_custom_call.1} parent=1 // pred_check_branch
      %44 = sbr.rel (0) target = $region33
    $region32: #{tpu_custom_call.1} parent=1 // pred_region
      _
    $region33: #{tpu_custom_call.1} parent=1 // pred_fallthru
      _
    // Predicated region
    $region34: #{tpu_custom_call.1} parent=1 // pred_check
      _
    $region35: #{tpu_custom_call.1} parent=1 // pred_check_branch
      %46 = sbr.rel (0) target = $region37
    $region36: #{tpu_custom_call.1} parent=1 // pred_region
      _
    $region37: #{tpu_custom_call.1} parent=1 // pred_fallthru
      _
    // Predicated region
    $region38: #{tpu_custom_call.1} parent=1 // pred_check
      _
    $region39: #{tpu_custom_call.1} parent=1 // pred_check_branch
      %48 = sbr.rel (0) target = $region41
    $region40: #{tpu_custom_call.1} parent=1 // pred_region
      %50 = dma.done [#allocation5], 16384
    $region41: #{tpu_custom_call.1} parent=1 // pred_fallthru
      _
    %v52 = vld [vmem:[%s1] sm:$0xff]
    %v53 = vld [vmem:[%s1 + $0x8] sm:$0xff]
    %v54 = vld [vmem:[%s1 + $0x10] sm:$0xff]
    %v55 = vld [vmem:[%s1 + $0x18] sm:$0xff]
    %v56 = vld [vmem:[%s1 + $0x20] sm:$0xff]
    %v57 = vld [vmem:[%s1 + $0x28] sm:$0xff]
    %v58 = vld [vmem:[%s1 + $0x30] sm:$0xff]
    %v59 = vld [vmem:[%s1 + $0x38] sm:$0xff]
    %v60 = vld [vmem:[%s1 + $0x40] sm:$0xff]
    %v61 = vld [vmem:[%s1 + $0x48] sm:$0xff]
    %v62 = vld [vmem:[%s1 + $0x50] sm:$0xff]
    %v63 = vld [vmem:[%s1 + $0x58] sm:$0xff]
    %v64 = vld [vmem:[%s1 + $0x60] sm:$0xff]
    %v65 = vld [vmem:[%s1 + $0x68] sm:$0xff]
    %v66 = vld [vmem:[%s1 + $0x70] sm:$0xff]
    %v67 = vld [vmem:[%s1 + $0x78] sm:$0xff]
    %v68 = vpack.c.bf16 %v60, %v52
    %v69 = vpack.c.bf16 %v61, %v53
    %v70 = vpack.c.bf16 %v62, %v54
    %v71 = vpack.c.bf16 %v63, %v55
    %v72 = vpack.c.bf16 %v64, %v56
    %v73 = vpack.c.bf16 %v65, %v57
    %v74 = vpack.c.bf16 %v66, %v58
    %v75 = vpack.c.bf16 %v67, %v59
    %v76 = vld [vmem:[#allocation4] sm:$0xff]
    %v77 = vld [vmem:[#allocation4 + $0x8] sm:$0xff]
    %v78 = vld [vmem:[#allocation4 + $0x10] sm:$0xff]
    %v79 = vld [vmem:[#allocation4 + $0x18] sm:$0xff]
    %v80 = vld [vmem:[#allocation4 + $0x20] sm:$0xff]
    %v81 = vld [vmem:[#allocation4 + $0x28] sm:$0xff]
    %v82 = vld [vmem:[#allocation4 + $0x30] sm:$0xff]
    %v83 = vld [vmem:[#allocation4 + $0x38] sm:$0xff]
    %v84 = vld [vmem:[#allocation4 + $0x40] sm:$0xff]
    %v85 = vld [vmem:[#allocation4 + $0x48] sm:$0xff]
    %v86 = vld [vmem:[#allocation4 + $0x50] sm:$0xff]
    %v87 = vld [vmem:[#allocation4 + $0x58] sm:$0xff]
    %v88 = vld [vmem:[#allocation4 + $0x60] sm:$0xff]
    %v89 = vld [vmem:[#allocation4 + $0x68] sm:$0xff]
    %v90 = vld [vmem:[#allocation4 + $0x70] sm:$0xff]
    %v91 = vld [vmem:[#allocation4 + $0x78] sm:$0xff]
    %v92 = vld [vmem:[#allocation4 + $0x80] sm:$0xff]
    %v93 = vld [vmem:[#allocation4 + $0x88] sm:$0xff]
    %v94 = vld [vmem:[#allocation4 + $0x90] sm:$0xff]
    %v95 = vld [vmem:[#allocation4 + $0x98] sm:$0xff]
    %v96 = vld [vmem:[#allocation4 + $0xa0] sm:$0xff]
    %v97 = vld [vmem:[#allocation4 + $0xa8] sm:$0xff]
    %v98 = vld [vmem:[#allocation4 + $0xb0] sm:$0xff]
    %v99 = vld [vmem:[#allocation4 + $0xb8] sm:$0xff]
    %v100 = vld [vmem:[#allocation4 + $0xc0] sm:$0xff]
    %v101 = vld [vmem:[#allocation4 + $0xc8] sm:$0xff]
    %v102 = vld [vmem:[#allocation4 + $0xd0] sm:$0xff]
    %v103 = vld [vmem:[#allocation4 + $0xd8] sm:$0xff]
    %v104 = vld [vmem:[#allocation4 + $0xe0] sm:$0xff]
    %v105 = vld [vmem:[#allocation4 + $0xe8] sm:$0xff]
    %v106 = vld [vmem:[#allocation4 + $0xf0] sm:$0xff]
    %v107 = vld [vmem:[#allocation4 + $0xf8] sm:$0xff]
    %v108 = vld [vmem:[#allocation4 + $0x100] sm:$0xff]
    %v109 = vld [vmem:[#allocation4 + $0x108] sm:$0xff]
    %v110 = vld [vmem:[#allocation4 + $0x110] sm:$0xff]
    %v111 = vld [vmem:[#allocation4 + $0x118] sm:$0xff]
    %v112 = vld [vmem:[#allocation4 + $0x120] sm:$0xff]
    %v113 = vld [vmem:[#allocation4 + $0x128] sm:$0xff]
    %v114 = vld [vmem:[#allocation4 + $0x130] sm:$0xff]
    %v115 = vld [vmem:[#allocation4 + $0x138] sm:$0xff]
    %v116 = vld [vmem:[#allocation4 + $0x140] sm:$0xff]
    %v117 = vld [vmem:[#allocation4 + $0x148] sm:$0xff]
    %v118 = vld [vmem:[#allocation4 + $0x150] sm:$0xff]
    %v119 = vld [vmem:[#allocation4 + $0x158] sm:$0xff]
    %v120 = vld [vmem:[#allocation4 + $0x160] sm:$0xff]
    %v121 = vld [vmem:[#allocation4 + $0x168] sm:$0xff]
    %v122 = vld [vmem:[#allocation4 + $0x170] sm:$0xff]
    %v123 = vld [vmem:[#allocation4 + $0x178] sm:$0xff]
    %v124 = vld [vmem:[#allocation4 + $0x180] sm:$0xff]
    %v125 = vld [vmem:[#allocation4 + $0x188] sm:$0xff]
    %v126 = vld [vmem:[#allocation4 + $0x190] sm:$0xff]
    %v127 = vld [vmem:[#allocation4 + $0x198] sm:$0xff]
    %v128 = vld [vmem:[#allocation4 + $0x1a0] sm:$0xff]
    %v129 = vld [vmem:[#allocation4 + $0x1a8] sm:$0xff]
    %v130 = vld [vmem:[#allocation4 + $0x1b0] sm:$0xff]
    %v131 = vld [vmem:[#allocation4 + $0x1b8] sm:$0xff]
    %v132 = vld [vmem:[#allocation4 + $0x1c0] sm:$0xff]
    %v133 = vld [vmem:[#allocation4 + $0x1c8] sm:$0xff]
    %v134 = vld [vmem:[#allocation4 + $0x1d0] sm:$0xff]
    %v135 = vld [vmem:[#allocation4 + $0x1d8] sm:$0xff]
    %v136 = vld [vmem:[#allocation4 + $0x1e0] sm:$0xff]
    %v137 = vld [vmem:[#allocation4 + $0x1e8] sm:$0xff]
    %v138 = vld [vmem:[#allocation4 + $0x1f0] sm:$0xff]
    %v139 = vld [vmem:[#allocation4 + $0x1f8] sm:$0xff]
    %v140 = vld [vmem:[#allocation4 + $0x200] sm:$0xff]
    %v141 = vld [vmem:[#allocation4 + $0x208] sm:$0xff]
    %v142 = vld [vmem:[#allocation4 + $0x210] sm:$0xff]
    %v143 = vld [vmem:[#allocation4 + $0x218] sm:$0xff]
    %v144 = vld [vmem:[#allocation4 + $0x220] sm:$0xff]
    %v145 = vld [vmem:[#allocation4 + $0x228] sm:$0xff]
    %v146 = vld [vmem:[#allocation4 + $0x230] sm:$0xff]
    %v147 = vld [vmem:[#allocation4 + $0x238] sm:$0xff]
    %v148 = vld [vmem:[#allocation4 + $0x240] sm:$0xff]
    %v149 = vld [vmem:[#allocation4 + $0x248] sm:$0xff]
    %v150 = vld [vmem:[#allocation4 + $0x250] sm:$0xff]
    %v151 = vld [vmem:[#allocation4 + $0x258] sm:$0xff]
    %v152 = vld [vmem:[#allocation4 + $0x260] sm:$0xff]
    %v153 = vld [vmem:[#allocation4 + $0x268] sm:$0xff]
    %v154 = vld [vmem:[#allocation4 + $0x270] sm:$0xff]
    %v155 = vld [vmem:[#allocation4 + $0x278] sm:$0xff]
    %v156 = vld [vmem:[#allocation4 + $0x280] sm:$0xff]
    %v157 = vld [vmem:[#allocation4 + $0x288] sm:$0xff]
    %v158 = vld [vmem:[#allocation4 + $0x290] sm:$0xff]
    %v159 = vld [vmem:[#allocation4 + $0x298] sm:$0xff]
    %v160 = vld [vmem:[#allocation4 + $0x2a0] sm:$0xff]
    %v161 = vld [vmem:[#allocation4 + $0x2a8] sm:$0xff]
    %v162 = vld [vmem:[#allocation4 + $0x2b0] sm:$0xff]
    %v163 = vld [vmem:[#allocation4 + $0x2b8] sm:$0xff]
    %v164 = vld [vmem:[#allocation4 + $0x2c0] sm:$0xff]
    %v165 = vld [vmem:[#allocation4 + $0x2c8] sm:$0xff]
    %v166 = vld [vmem:[#allocation4 + $0x2d0] sm:$0xff]
    %v167 = vld [vmem:[#allocation4 + $0x2d8] sm:$0xff]
    %v168 = vld [vmem:[#allocation4 + $0x2e0] sm:$0xff]
    %v169 = vld [vmem:[#allocation4 + $0x2e8] sm:$0xff]
    %v170 = vld [vmem:[#allocation4 + $0x2f0] sm:$0xff]
    %v171 = vld [vmem:[#allocation4 + $0x2f8] sm:$0xff]
    %v172 = vld [vmem:[#allocation4 + $0x300] sm:$0xff]
    %v173 = vld [vmem:[#allocation4 + $0x308] sm:$0xff]
    %v174 = vld [vmem:[#allocation4 + $0x310] sm:$0xff]
    %v175 = vld [vmem:[#allocation4 + $0x318] sm:$0xff]
    %v176 = vld [vmem:[#allocation4 + $0x320] sm:$0xff]
    %v177 = vld [vmem:[#allocation4 + $0x328] sm:$0xff]
    %v178 = vld [vmem:[#allocation4 + $0x330] sm:$0xff]
    %v179 = vld [vmem:[#allocation4 + $0x338] sm:$0xff]
    %v180 = vld [vmem:[#allocation4 + $0x340] sm:$0xff]
    %v181 = vld [vmem:[#allocation4 + $0x348] sm:$0xff]
    %v182 = vld [vmem:[#allocation4 + $0x350] sm:$0xff]
    %v183 = vld [vmem:[#allocation4 + $0x358] sm:$0xff]
    %v184 = vld [vmem:[#allocation4 + $0x360] sm:$0xff]
    %v185 = vld [vmem:[#allocation4 + $0x368] sm:$0xff]
    %v186 = vld [vmem:[#allocation4 + $0x370] sm:$0xff]
    %v187 = vld [vmem:[#allocation4 + $0x378] sm:$0xff]
    %v188 = vld [vmem:[#allocation4 + $0x380] sm:$0xff]
    %v189 = vld [vmem:[#allocation4 + $0x388] sm:$0xff]
    %v190 = vld [vmem:[#allocation4 + $0x390] sm:$0xff]
    %v191 = vld [vmem:[#allocation4 + $0x398] sm:$0xff]
    %v192 = vld [vmem:[#allocation4 + $0x3a0] sm:$0xff]
    %v193 = vld [vmem:[#allocation4 + $0x3a8] sm:$0xff]
    %v194 = vld [vmem:[#allocation4 + $0x3b0] sm:$0xff]
    %v195 = vld [vmem:[#allocation4 + $0x3b8] sm:$0xff]
    %v196 = vld [vmem:[#allocation4 + $0x3c0] sm:$0xff]
    %v197 = vld [vmem:[#allocation4 + $0x3c8] sm:$0xff]
    %v198 = vld [vmem:[#allocation4 + $0x3d0] sm:$0xff]
    %v199 = vld [vmem:[#allocation4 + $0x3d8] sm:$0xff]
    %v200 = vld [vmem:[#allocation4 + $0x3e0] sm:$0xff]
    %v201 = vld [vmem:[#allocation4 + $0x3e8] sm:$0xff]
    %v202 = vld [vmem:[#allocation4 + $0x3f0] sm:$0xff]
    %v203 = vld [vmem:[#allocation4 + $0x3f8] sm:$0xff]
    %v204 = vld [vmem:[%s3] sm:$0x3]
    %v206 = vperm.slane %v204, 0
    %v207 = vperm.slane %v204, 1
    %v338 = vunpack.c.l.b16 %v76
    %v339 = vunpack.c.h.b16 %v76
    %v340 = vunpack.c.l.b16 %v77
    %v341 = vunpack.c.h.b16 %v77
    %v342 = vunpack.c.l.b16 %v78
    %v343 = vunpack.c.h.b16 %v78
    %v344 = vunpack.c.l.b16 %v79
    %v345 = vunpack.c.h.b16 %v79
    %v346 = vunpack.c.l.b16 %v80
    %v347 = vunpack.c.h.b16 %v80
    %v348 = vunpack.c.l.b16 %v81
    %v349 = vunpack.c.h.b16 %v81
    %v350 = vunpack.c.l.b16 %v82
    %v351 = vunpack.c.h.b16 %v82
    %v352 = vunpack.c.l.b16 %v83
    %v353 = vunpack.c.h.b16 %v83
    %v354 = vunpack.c.l.b16 %v84
    %v355 = vunpack.c.h.b16 %v84
    %v356 = vunpack.c.l.b16 %v85
    %v357 = vunpack.c.h.b16 %v85
    %v358 = vunpack.c.l.b16 %v86
    %v359 = vunpack.c.h.b16 %v86
    %v360 = vunpack.c.l.b16 %v87
    %v361 = vunpack.c.h.b16 %v87
    %v362 = vunpack.c.l.b16 %v88
    %v363 = vunpack.c.h.b16 %v88
    %v364 = vunpack.c.l.b16 %v89
    %v365 = vunpack.c.h.b16 %v89
    %v366 = vunpack.c.l.b16 %v90
    %v367 = vunpack.c.h.b16 %v90
    %v368 = vunpack.c.l.b16 %v91
    %v369 = vunpack.c.h.b16 %v91
    %v370 = vunpack.c.l.b16 %v92
    %v371 = vunpack.c.h.b16 %v92
    %v372 = vunpack.c.l.b16 %v93
    %v373 = vunpack.c.h.b16 %v93
    %v374 = vunpack.c.l.b16 %v94
    %v375 = vunpack.c.h.b16 %v94
    %v376 = vunpack.c.l.b16 %v95
    %v377 = vunpack.c.h.b16 %v95
    %v378 = vunpack.c.l.b16 %v96
    %v379 = vunpack.c.h.b16 %v96
    %v380 = vunpack.c.l.b16 %v97
    %v381 = vunpack.c.h.b16 %v97
    %v382 = vunpack.c.l.b16 %v98
    %v383 = vunpack.c.h.b16 %v98
    %v384 = vunpack.c.l.b16 %v99
    %v385 = vunpack.c.h.b16 %v99
    %v386 = vunpack.c.l.b16 %v100
    %v387 = vunpack.c.h.b16 %v100
    %v388 = vunpack.c.l.b16 %v101
    %v389 = vunpack.c.h.b16 %v101
    %v390 = vunpack.c.l.b16 %v102
    %v391 = vunpack.c.h.b16 %v102
    %v392 = vunpack.c.l.b16 %v103
    %v393 = vunpack.c.h.b16 %v103
    %v394 = vunpack.c.l.b16 %v104
    %v395 = vunpack.c.h.b16 %v104
    %v396 = vunpack.c.l.b16 %v105
    %v397 = vunpack.c.h.b16 %v105
    %v398 = vunpack.c.l.b16 %v106
    %v399 = vunpack.c.h.b16 %v106
    %v400 = vunpack.c.l.b16 %v107
    %v401 = vunpack.c.h.b16 %v107
    %v402 = vunpack.c.l.b16 %v108
    %v403 = vunpack.c.h.b16 %v108
    %v404 = vunpack.c.l.b16 %v109
    %v405 = vunpack.c.h.b16 %v109
    %v406 = vunpack.c.l.b16 %v110
    %v407 = vunpack.c.h.b16 %v110
    %v408 = vunpack.c.l.b16 %v111
    %v409 = vunpack.c.h.b16 %v111
    %v410 = vunpack.c.l.b16 %v112
    %v411 = vunpack.c.h.b16 %v112
    %v412 = vunpack.c.l.b16 %v113
    %v413 = vunpack.c.h.b16 %v113
    %v414 = vunpack.c.l.b16 %v114
    %v415 = vunpack.c.h.b16 %v114
    %v416 = vunpack.c.l.b16 %v115
    %v417 = vunpack.c.h.b16 %v115
    %v418 = vunpack.c.l.b16 %v116
    %v419 = vunpack.c.h.b16 %v116
    %v420 = vunpack.c.l.b16 %v117
    %v421 = vunpack.c.h.b16 %v117
    %v422 = vunpack.c.l.b16 %v118
    %v423 = vunpack.c.h.b16 %v118
    %v424 = vunpack.c.l.b16 %v119
    %v425 = vunpack.c.h.b16 %v119
    %v426 = vunpack.c.l.b16 %v120
    %v427 = vunpack.c.h.b16 %v120
    %v428 = vunpack.c.l.b16 %v121
    %v429 = vunpack.c.h.b16 %v121
    %v430 = vunpack.c.l.b16 %v122
    %v431 = vunpack.c.h.b16 %v122
    %v432 = vunpack.c.l.b16 %v123
    %v433 = vunpack.c.h.b16 %v123
    %v434 = vunpack.c.l.b16 %v124
    %v435 = vunpack.c.h.b16 %v124
    %v436 = vunpack.c.l.b16 %v125
    %v437 = vunpack.c.h.b16 %v125
    %v438 = vunpack.c.l.b16 %v126
    %v439 = vunpack.c.h.b16 %v126
    %v440 = vunpack.c.l.b16 %v127
    %v441 = vunpack.c.h.b16 %v127
    %v442 = vunpack.c.l.b16 %v128
    %v443 = vunpack.c.h.b16 %v128
    %v444 = vunpack.c.l.b16 %v129
    %v445 = vunpack.c.h.b16 %v129
    %v446 = vunpack.c.l.b16 %v130
    %v447 = vunpack.c.h.b16 %v130
    %v448 = vunpack.c.l.b16 %v131
    %v449 = vunpack.c.h.b16 %v131
    %v450 = vunpack.c.l.b16 %v132
    %v451 = vunpack.c.h.b16 %v132
    %v452 = vunpack.c.l.b16 %v133
    %v453 = vunpack.c.h.b16 %v133
    %v454 = vunpack.c.l.b16 %v134
    %v455 = vunpack.c.h.b16 %v134
    %v456 = vunpack.c.l.b16 %v135
    %v457 = vunpack.c.h.b16 %v135
    %v458 = vunpack.c.l.b16 %v136
    %v459 = vunpack.c.h.b16 %v136
    %v460 = vunpack.c.l.b16 %v137
    %v461 = vunpack.c.h.b16 %v137
    %v462 = vunpack.c.l.b16 %v138
    %v463 = vunpack.c.h.b16 %v138
    %v464 = vunpack.c.l.b16 %v139
    %v465 = vunpack.c.h.b16 %v139
    %v466 = vunpack.c.l.b16 %v140
    %v467 = vunpack.c.h.b16 %v140
    %v468 = vunpack.c.l.b16 %v141
    %v469 = vunpack.c.h.b16 %v141
    %v470 = vunpack.c.l.b16 %v142
    %v471 = vunpack.c.h.b16 %v142
    %v472 = vunpack.c.l.b16 %v143
    %v473 = vunpack.c.h.b16 %v143
    %v474 = vunpack.c.l.b16 %v144
    %v475 = vunpack.c.h.b16 %v144
    %v476 = vunpack.c.l.b16 %v145
    %v477 = vunpack.c.h.b16 %v145
    %v478 = vunpack.c.l.b16 %v146
    %v479 = vunpack.c.h.b16 %v146
    %v480 = vunpack.c.l.b16 %v147
    %v481 = vunpack.c.h.b16 %v147
    %v482 = vunpack.c.l.b16 %v148
    %v483 = vunpack.c.h.b16 %v148
    %v484 = vunpack.c.l.b16 %v149
    %v485 = vunpack.c.h.b16 %v149
    %v486 = vunpack.c.l.b16 %v150
    %v487 = vunpack.c.h.b16 %v150
    %v488 = vunpack.c.l.b16 %v151
    %v489 = vunpack.c.h.b16 %v151
    %v490 = vunpack.c.l.b16 %v152
    %v491 = vunpack.c.h.b16 %v152
    %v492 = vunpack.c.l.b16 %v153
    %v493 = vunpack.c.h.b16 %v153
    %v494 = vunpack.c.l.b16 %v154
    %v495 = vunpack.c.h.b16 %v154
    %v496 = vunpack.c.l.b16 %v155
    %v497 = vunpack.c.h.b16 %v155
    %v498 = vunpack.c.l.b16 %v156
    %v499 = vunpack.c.h.b16 %v156
    %v500 = vunpack.c.l.b16 %v157
    %v501 = vunpack.c.h.b16 %v157
    %v502 = vunpack.c.l.b16 %v158
    %v503 = vunpack.c.h.b16 %v158
    %v504 = vunpack.c.l.b16 %v159
    %v505 = vunpack.c.h.b16 %v159
    %v506 = vunpack.c.l.b16 %v160
    %v507 = vunpack.c.h.b16 %v160
    %v508 = vunpack.c.l.b16 %v161
    %v509 = vunpack.c.h.b16 %v161
    %v510 = vunpack.c.l.b16 %v162
    %v511 = vunpack.c.h.b16 %v162
    %v512 = vunpack.c.l.b16 %v163
    %v513 = vunpack.c.h.b16 %v163
    %v514 = vunpack.c.l.b16 %v164
    %v515 = vunpack.c.h.b16 %v164
    %v516 = vunpack.c.l.b16 %v165
    %v517 = vunpack.c.h.b16 %v165
    %v518 = vunpack.c.l.b16 %v166
    %v519 = vunpack.c.h.b16 %v166
    %v520 = vunpack.c.l.b16 %v167
    %v521 = vunpack.c.h.b16 %v167
    %v522 = vunpack.c.l.b16 %v168
    %v523 = vunpack.c.h.b16 %v168
    %v524 = vunpack.c.l.b16 %v169
    %v525 = vunpack.c.h.b16 %v169
    %v526 = vunpack.c.l.b16 %v170
    %v527 = vunpack.c.h.b16 %v170
    %v528 = vunpack.c.l.b16 %v171
    %v529 = vunpack.c.h.b16 %v171
    %v530 = vunpack.c.l.b16 %v172
    %v531 = vunpack.c.h.b16 %v172
    %v532 = vunpack.c.l.b16 %v173
    %v533 = vunpack.c.h.b16 %v173
    %v534 = vunpack.c.l.b16 %v174
    %v535 = vunpack.c.h.b16 %v174
    %v536 = vunpack.c.l.b16 %v175
    %v537 = vunpack.c.h.b16 %v175
    %v538 = vunpack.c.l.b16 %v176
    %v539 = vunpack.c.h.b16 %v176
    %v540 = vunpack.c.l.b16 %v177
    %v541 = vunpack.c.h.b16 %v177
    %v542 = vunpack.c.l.b16 %v178
    %v543 = vunpack.c.h.b16 %v178
    %v544 = vunpack.c.l.b16 %v179
    %v545 = vunpack.c.h.b16 %v179
    %v546 = vunpack.c.l.b16 %v180
    %v547 = vunpack.c.h.b16 %v180
    %v548 = vunpack.c.l.b16 %v181
    %v549 = vunpack.c.h.b16 %v181
    %v550 = vunpack.c.l.b16 %v182
    %v551 = vunpack.c.h.b16 %v182
    %v552 = vunpack.c.l.b16 %v183
    %v553 = vunpack.c.h.b16 %v183
    %v554 = vunpack.c.l.b16 %v184
    %v555 = vunpack.c.h.b16 %v184
    %v556 = vunpack.c.l.b16 %v185
    %v557 = vunpack.c.h.b16 %v185
    %v558 = vunpack.c.l.b16 %v186
    %v559 = vunpack.c.h.b16 %v186
    %v560 = vunpack.c.l.b16 %v187
    %v561 = vunpack.c.h.b16 %v187
    %v562 = vunpack.c.l.b16 %v188
    %v563 = vunpack.c.h.b16 %v188
    %v564 = vunpack.c.l.b16 %v189
    %v565 = vunpack.c.h.b16 %v189
    %v566 = vunpack.c.l.b16 %v190
    %v567 = vunpack.c.h.b16 %v190
    %v568 = vunpack.c.l.b16 %v191
    %v569 = vunpack.c.h.b16 %v191
    %v570 = vunpack.c.l.b16 %v192
    %v571 = vunpack.c.h.b16 %v192
    %v572 = vunpack.c.l.b16 %v193
    %v573 = vunpack.c.h.b16 %v193
    %v574 = vunpack.c.l.b16 %v194
    %v575 = vunpack.c.h.b16 %v194
    %v576 = vunpack.c.l.b16 %v195
    %v577 = vunpack.c.h.b16 %v195
    %v578 = vunpack.c.l.b16 %v196
    %v579 = vunpack.c.h.b16 %v196
    %v580 = vunpack.c.l.b16 %v197
    %v581 = vunpack.c.h.b16 %v197
    %v582 = vunpack.c.l.b16 %v198
    %v583 = vunpack.c.h.b16 %v198
    %v584 = vunpack.c.l.b16 %v199
    %v585 = vunpack.c.h.b16 %v199
    %v586 = vunpack.c.l.b16 %v200
    %v587 = vunpack.c.h.b16 %v200
    %v588 = vunpack.c.l.b16 %v201
    %v589 = vunpack.c.h.b16 %v201
    %v590 = vunpack.c.l.b16 %v202
    %v591 = vunpack.c.h.b16 %v202
    %v592 = vunpack.c.l.b16 %v203
    %v593 = vunpack.c.h.b16 %v203
    %v594 = vpack.c.b16 %v340, %v338
    %v595 = vpack.c.b16 %v341, %v339
    %v596 = vpack.c.b16 %v344, %v342
    %v597 = vpack.c.b16 %v345, %v343
    %v598 = vpack.c.b16 %v348, %v346
    %v599 = vpack.c.b16 %v349, %v347
    %v600 = vpack.c.b16 %v352, %v350
    %v601 = vpack.c.b16 %v353, %v351
    %v602 = vpack.c.b16 %v356, %v354
    %v603 = vpack.c.b16 %v357, %v355
    %v604 = vpack.c.b16 %v360, %v358
    %v605 = vpack.c.b16 %v361, %v359
    %v606 = vpack.c.b16 %v364, %v362
    %v607 = vpack.c.b16 %v365, %v363
    %v608 = vpack.c.b16 %v368, %v366
    %v609 = vpack.c.b16 %v369, %v367
    %v610 = vpack.c.b16 %v372, %v370
    %v611 = vpack.c.b16 %v373, %v371
    %v612 = vpack.c.b16 %v376, %v374
    %v613 = vpack.c.b16 %v377, %v375
    %v614 = vpack.c.b16 %v380, %v378
    %v615 = vpack.c.b16 %v381, %v379
    %v616 = vpack.c.b16 %v384, %v382
    %v617 = vpack.c.b16 %v385, %v383
    %v618 = vpack.c.b16 %v388, %v386
    %v619 = vpack.c.b16 %v389, %v387
    %v620 = vpack.c.b16 %v392, %v390
    %v621 = vpack.c.b16 %v393, %v391
    %v622 = vpack.c.b16 %v396, %v394
    %v623 = vpack.c.b16 %v397, %v395
    %v624 = vpack.c.b16 %v400, %v398
    %v625 = vpack.c.b16 %v401, %v399
    %v626 = vpack.c.b16 %v404, %v402
    %v627 = vpack.c.b16 %v405, %v403
    %v628 = vpack.c.b16 %v408, %v406
    %v629 = vpack.c.b16 %v409, %v407
    %v630 = vpack.c.b16 %v412, %v410
    %v631 = vpack.c.b16 %v413, %v411
    %v632 = vpack.c.b16 %v416, %v414
    %v633 = vpack.c.b16 %v417, %v415
    %v634 = vpack.c.b16 %v420, %v418
    %v635 = vpack.c.b16 %v421, %v419
    %v636 = vpack.c.b16 %v424, %v422
    %v637 = vpack.c.b16 %v425, %v423
    %v638 = vpack.c.b16 %v428, %v426
    %v639 = vpack.c.b16 %v429, %v427
    %v640 = vpack.c.b16 %v432, %v430
    %v641 = vpack.c.b16 %v433, %v431
    %v642 = vpack.c.b16 %v436, %v434
    %v643 = vpack.c.b16 %v437, %v435
    %v644 = vpack.c.b16 %v440, %v438
    %v645 = vpack.c.b16 %v441, %v439
    %v646 = vpack.c.b16 %v444, %v442
    %v647 = vpack.c.b16 %v445, %v443
    %v648 = vpack.c.b16 %v448, %v446
    %v649 = vpack.c.b16 %v449, %v447
    %v650 = vpack.c.b16 %v452, %v450
    %v651 = vpack.c.b16 %v453, %v451
    %v652 = vpack.c.b16 %v456, %v454
    %v653 = vpack.c.b16 %v457, %v455
    %v654 = vpack.c.b16 %v460, %v458
    %v655 = vpack.c.b16 %v461, %v459
    %v656 = vpack.c.b16 %v464, %v462
    %v657 = vpack.c.b16 %v465, %v463
    %v658 = vpack.c.b16 %v468, %v466
    %v659 = vpack.c.b16 %v469, %v467
    %v660 = vpack.c.b16 %v472, %v470
    %v661 = vpack.c.b16 %v473, %v471
    %v662 = vpack.c.b16 %v476, %v474
    %v663 = vpack.c.b16 %v477, %v475
    %v664 = vpack.c.b16 %v480, %v478
    %v665 = vpack.c.b16 %v481, %v479
    %v666 = vpack.c.b16 %v484, %v482
    %v667 = vpack.c.b16 %v485, %v483
    %v668 = vpack.c.b16 %v488, %v486
    %v669 = vpack.c.b16 %v489, %v487
    %v670 = vpack.c.b16 %v492, %v490
    %v671 = vpack.c.b16 %v493, %v491
    %v672 = vpack.c.b16 %v496, %v494
    %v673 = vpack.c.b16 %v497, %v495
    %v674 = vpack.c.b16 %v500, %v498
    %v675 = vpack.c.b16 %v501, %v499
    %v676 = vpack.c.b16 %v504, %v502
    %v677 = vpack.c.b16 %v505, %v503
    %v678 = vpack.c.b16 %v508, %v506
    %v679 = vpack.c.b16 %v509, %v507
    %v680 = vpack.c.b16 %v512, %v510
    %v681 = vpack.c.b16 %v513, %v511
    %v682 = vpack.c.b16 %v516, %v514
    %v683 = vpack.c.b16 %v517, %v515
    %v684 = vpack.c.b16 %v520, %v518
    %v685 = vpack.c.b16 %v521, %v519
    %v686 = vpack.c.b16 %v524, %v522
    %v687 = vpack.c.b16 %v525, %v523
    %v688 = vpack.c.b16 %v528, %v526
    %v689 = vpack.c.b16 %v529, %v527
    %v690 = vpack.c.b16 %v532, %v530
    %v691 = vpack.c.b16 %v533, %v531
    %v692 = vpack.c.b16 %v536, %v534
    %v693 = vpack.c.b16 %v537, %v535
    %v694 = vpack.c.b16 %v540, %v538
    %v695 = vpack.c.b16 %v541, %v539
    %v696 = vpack.c.b16 %v544, %v542
    %v697 = vpack.c.b16 %v545, %v543
    %v698 = vpack.c.b16 %v548, %v546
    %v699 = vpack.c.b16 %v549, %v547
    %v700 = vpack.c.b16 %v552, %v550
    %v701 = vpack.c.b16 %v553, %v551
    %v702 = vpack.c.b16 %v556, %v554
    %v703 = vpack.c.b16 %v557, %v555
    %v704 = vpack.c.b16 %v560, %v558
    %v705 = vpack.c.b16 %v561, %v559
    %v706 = vpack.c.b16 %v564, %v562
    %v707 = vpack.c.b16 %v565, %v563
    %v708 = vpack.c.b16 %v568, %v566
    %v709 = vpack.c.b16 %v569, %v567
    %v710 = vpack.c.b16 %v572, %v570
    %v711 = vpack.c.b16 %v573, %v571
    %v712 = vpack.c.b16 %v576, %v574
    %v713 = vpack.c.b16 %v577, %v575
    %v714 = vpack.c.b16 %v580, %v578
    %v715 = vpack.c.b16 %v581, %v579
    %v716 = vpack.c.b16 %v584, %v582
    %v717 = vpack.c.b16 %v585, %v583
    %v718 = vpack.c.b16 %v588, %v586
    %v719 = vpack.c.b16 %v589, %v587
    %v720 = vpack.c.b16 %v592, %v590
    %v721 = vpack.c.b16 %v593, %v591
    %850 = vmatpush.bf16.msra.mxu0 %v608
    %851 = vmatpush.bf16.msra.mxu0 %v606
    %852 = vmatpush.bf16.msra.mxu0 %v604
    %853 = vmatpush.bf16.msra.mxu0 %v602
    %854 = vmatpush.bf16.msra.mxu0 %v600
    %855 = vmatpush.bf16.msra.mxu0 %v598
    %856 = vmatpush.bf16.msra.mxu0 %v596
    %857 = vmatpush.bf16.msra.mxu0 %v594
    %858 = vmatmul.bf16.gmra.mxu0 %v68
    %v859 = vpop.f32.mrf.mxu0
    %v860 = vadd.f32 %v206, %v859
    %v861 = vpop.f32.mrf.mxu0
    %v862 = vadd.f32 %v206, %v861
    %863 = vdwg.mxu0
    %864 = vmatpush.bf16.msra.mxu0 %v624
    %865 = vmatpush.bf16.msra.mxu0 %v622
    %866 = vmatpush.bf16.msra.mxu0 %v620
    %867 = vmatpush.bf16.msra.mxu0 %v618
    %868 = vmatpush.bf16.msra.mxu0 %v616
    %869 = vmatpush.bf16.msra.mxu0 %v614
    %870 = vmatpush.bf16.msra.mxu0 %v612
    %871 = vmatpush.bf16.msra.mxu0 %v610
    %872 = vmatmul.bf16.gmra.mxu0 %v69
    %v873 = vpop.f32.mrf.mxu0
    %v874 = vadd.f32 %v860, %v873
    %v875 = vpop.f32.mrf.mxu0
    %v876 = vadd.f32 %v862, %v875
    %877 = vdwg.mxu0
    %878 = vmatpush.bf16.msra.mxu0 %v640
    %879 = vmatpush.bf16.msra.mxu0 %v638
    %880 = vmatpush.bf16.msra.mxu0 %v636
    %881 = vmatpush.bf16.msra.mxu0 %v634
    %882 = vmatpush.bf16.msra.mxu0 %v632
    %883 = vmatpush.bf16.msra.mxu0 %v630
    %884 = vmatpush.bf16.msra.mxu0 %v628
    %885 = vmatpush.bf16.msra.mxu0 %v626
    %886 = vmatmul.bf16.gmra.mxu0 %v70
    %v887 = vpop.f32.mrf.mxu0
    %v888 = vadd.f32 %v874, %v887
    %v889 = vpop.f32.mrf.mxu0
    %v890 = vadd.f32 %v876, %v889
    %891 = vdwg.mxu0
    %892 = vmatpush.bf16.msra.mxu0 %v656
    %893 = vmatpush.bf16.msra.mxu0 %v654
    %894 = vmatpush.bf16.msra.mxu0 %v652
    %895 = vmatpush.bf16.msra.mxu0 %v650
    %896 = vmatpush.bf16.msra.mxu0 %v648
    %897 = vmatpush.bf16.msra.mxu0 %v646
    %898 = vmatpush.bf16.msra.mxu0 %v644
    %899 = vmatpush.bf16.msra.mxu0 %v642
    %900 = vmatmul.bf16.gmra.mxu0 %v71
    %v901 = vpop.f32.mrf.mxu0
    %v902 = vadd.f32 %v888, %v901
    %v903 = vpop.f32.mrf.mxu0
    %v904 = vadd.f32 %v890, %v903
    %905 = vdwg.mxu0
    %906 = vmatpush.bf16.msra.mxu0 %v672
    %907 = vmatpush.bf16.msra.mxu0 %v670
    %908 = vmatpush.bf16.msra.mxu0 %v668
    %909 = vmatpush.bf16.msra.mxu0 %v666
    %910 = vmatpush.bf16.msra.mxu0 %v664
    %911 = vmatpush.bf16.msra.mxu0 %v662
    %912 = vmatpush.bf16.msra.mxu0 %v660
    %913 = vmatpush.bf16.msra.mxu0 %v658
    %914 = vmatmul.bf16.gmra.mxu0 %v72
    %v915 = vpop.f32.mrf.mxu0
    %v916 = vadd.f32 %v902, %v915
    %v917 = vpop.f32.mrf.mxu0
    %v918 = vadd.f32 %v904, %v917
    %919 = vdwg.mxu0
    %920 = vmatpush.bf16.msra.mxu0 %v688
    %921 = vmatpush.bf16.msra.mxu0 %v686
    %922 = vmatpush.bf16.msra.mxu0 %v684
    %923 = vmatpush.bf16.msra.mxu0 %v682
    %924 = vmatpush.bf16.msra.mxu0 %v680
    %925 = vmatpush.bf16.msra.mxu0 %v678
    %926 = vmatpush.bf16.msra.mxu0 %v676
    %927 = vmatpush.bf16.msra.mxu0 %v674
    %928 = vmatmul.bf16.gmra.mxu0 %v73
    %v929 = vpop.f32.mrf.mxu0
    %v930 = vadd.f32 %v916, %v929
    %v931 = vpop.f32.mrf.mxu0
    %v932 = vadd.f32 %v918, %v931
    %933 = vdwg.mxu0
    %934 = vmatpush.bf16.msra.mxu0 %v704
    %935 = vmatpush.bf16.msra.mxu0 %v702
    %936 = vmatpush.bf16.msra.mxu0 %v700
    %937 = vmatpush.bf16.msra.mxu0 %v698
    %938 = vmatpush.bf16.msra.mxu0 %v696
    %939 = vmatpush.bf16.msra.mxu0 %v694
    %940 = vmatpush.bf16.msra.mxu0 %v692
    %941 = vmatpush.bf16.msra.mxu0 %v690
    %942 = vmatmul.bf16.gmra.mxu0 %v74
    %v943 = vpop.f32.mrf.mxu0
    %v944 = vadd.f32 %v930, %v943
    %v945 = vpop.f32.mrf.mxu0
    %v946 = vadd.f32 %v932, %v945
    %947 = vdwg.mxu0
    %948 = vmatpush.bf16.msra.mxu0 %v720
    %949 = vmatpush.bf16.msra.mxu0 %v718
    %950 = vmatpush.bf16.msra.mxu0 %v716
    %951 = vmatpush.bf16.msra.mxu0 %v714
    %952 = vmatpush.bf16.msra.mxu0 %v712
    %953 = vmatpush.bf16.msra.mxu0 %v710
    %954 = vmatpush.bf16.msra.mxu0 %v708
    %955 = vmatpush.bf16.msra.mxu0 %v706
    %956 = vmatmul.bf16.gmra.mxu0 %v75
    %v957 = vpop.f32.mrf.mxu0
    %v958 = vadd.f32 %v944, %v957
    %v959 = vpop.f32.mrf.mxu0
    %v960 = vadd.f32 %v946, %v959
    %961 = vdwg.mxu0
    %962 = vmatpush.bf16.msra.mxu0 %v609
    %963 = vmatpush.bf16.msra.mxu0 %v607
    %964 = vmatpush.bf16.msra.mxu0 %v605
    %965 = vmatpush.bf16.msra.mxu0 %v603
    %966 = vmatpush.bf16.msra.mxu0 %v601
    %967 = vmatpush.bf16.msra.mxu0 %v599
    %968 = vmatpush.bf16.msra.mxu0 %v597
    %969 = vmatpush.bf16.msra.mxu0 %v595
    %970 = vmatmul.bf16.gmra.mxu0 %v68
    %v971 = vpop.f32.mrf.mxu0
    %v972 = vadd.f32 %v207, %v971
    %v973 = vpop.f32.mrf.mxu0
    %v974 = vadd.f32 %v207, %v973
    %975 = vdwg.mxu0
    %976 = vmatpush.bf16.msra.mxu0 %v625
    %977 = vmatpush.bf16.msra.mxu0 %v623
    %978 = vmatpush.bf16.msra.mxu0 %v621
    %979 = vmatpush.bf16.msra.mxu0 %v619
    %980 = vmatpush.bf16.msra.mxu0 %v617
    %981 = vmatpush.bf16.msra.mxu0 %v615
    %982 = vmatpush.bf16.msra.mxu0 %v613
    %983 = vmatpush.bf16.msra.mxu0 %v611
    %984 = vmatmul.bf16.gmra.mxu0 %v69
    %v985 = vpop.f32.mrf.mxu0
    %v986 = vadd.f32 %v972, %v985
    %v987 = vpop.f32.mrf.mxu0
    %v988 = vadd.f32 %v974, %v987
    %989 = vdwg.mxu0
    %990 = vmatpush.bf16.msra.mxu0 %v641
    %991 = vmatpush.bf16.msra.mxu0 %v639
    %992 = vmatpush.bf16.msra.mxu0 %v637
    %993 = vmatpush.bf16.msra.mxu0 %v635
    %994 = vmatpush.bf16.msra.mxu0 %v633
    %995 = vmatpush.bf16.msra.mxu0 %v631
    %996 = vmatpush.bf16.msra.mxu0 %v629
    %997 = vmatpush.bf16.msra.mxu0 %v627
    %998 = vmatmul.bf16.gmra.mxu0 %v70
    %v999 = vpop.f32.mrf.mxu0
    %v1000 = vadd.f32 %v986, %v999
    %v1001 = vpop.f32.mrf.mxu0
    %v1002 = vadd.f32 %v988, %v1001
    %1003 = vdwg.mxu0
    %1004 = vmatpush.bf16.msra.mxu0 %v657
    %1005 = vmatpush.bf16.msra.mxu0 %v655
    %1006 = vmatpush.bf16.msra.mxu0 %v653
    %1007 = vmatpush.bf16.msra.mxu0 %v651
    %1008 = vmatpush.bf16.msra.mxu0 %v649
    %1009 = vmatpush.bf16.msra.mxu0 %v647
    %1010 = vmatpush.bf16.msra.mxu0 %v645
    %1011 = vmatpush.bf16.msra.mxu0 %v643
    %1012 = vmatmul.bf16.gmra.mxu0 %v71
    %v1013 = vpop.f32.mrf.mxu0
    %v1014 = vadd.f32 %v1000, %v1013
    %v1015 = vpop.f32.mrf.mxu0
    %v1016 = vadd.f32 %v1002, %v1015
    %1017 = vdwg.mxu0
    %1018 = vmatpush.bf16.msra.mxu0 %v673
    %1019 = vmatpush.bf16.msra.mxu0 %v671
    %1020 = vmatpush.bf16.msra.mxu0 %v669
    %1021 = vmatpush.bf16.msra.mxu0 %v667
    %1022 = vmatpush.bf16.msra.mxu0 %v665
    %1023 = vmatpush.bf16.msra.mxu0 %v663
    %1024 = vmatpush.bf16.msra.mxu0 %v661
    %1025 = vmatpush.bf16.msra.mxu0 %v659
    %1026 = vmatmul.bf16.gmra.mxu0 %v72
    %v1027 = vpop.f32.mrf.mxu0
    %v1028 = vadd.f32 %v1014, %v1027
    %v1029 = vpop.f32.mrf.mxu0
    %v1030 = vadd.f32 %v1016, %v1029
    %1031 = vdwg.mxu0
    %1032 = vmatpush.bf16.msra.mxu0 %v689
    %1033 = vmatpush.bf16.msra.mxu0 %v687
    %1034 = vmatpush.bf16.msra.mxu0 %v685
    %1035 = vmatpush.bf16.msra.mxu0 %v683
    %1036 = vmatpush.bf16.msra.mxu0 %v681
    %1037 = vmatpush.bf16.msra.mxu0 %v679
    %1038 = vmatpush.bf16.msra.mxu0 %v677
    %1039 = vmatpush.bf16.msra.mxu0 %v675
    %1040 = vmatmul.bf16.gmra.mxu0 %v73
    %v1041 = vpop.f32.mrf.mxu0
    %v1042 = vadd.f32 %v1028, %v1041
    %v1043 = vpop.f32.mrf.mxu0
    %v1044 = vadd.f32 %v1030, %v1043
    %1045 = vdwg.mxu0
    %1046 = vmatpush.bf16.msra.mxu0 %v705
    %1047 = vmatpush.bf16.msra.mxu0 %v703
    %1048 = vmatpush.bf16.msra.mxu0 %v701
    %1049 = vmatpush.bf16.msra.mxu0 %v699
    %1050 = vmatpush.bf16.msra.mxu0 %v697
    %1051 = vmatpush.bf16.msra.mxu0 %v695
    %1052 = vmatpush.bf16.msra.mxu0 %v693
    %1053 = vmatpush.bf16.msra.mxu0 %v691
    %1054 = vmatmul.bf16.gmra.mxu0 %v74
    %v1055 = vpop.f32.mrf.mxu0
    %v1056 = vadd.f32 %v1042, %v1055
    %v1057 = vpop.f32.mrf.mxu0
    %v1058 = vadd.f32 %v1044, %v1057
    %1059 = vdwg.mxu0
    %1060 = vmatpush.bf16.msra.mxu0 %v721
    %1061 = vmatpush.bf16.msra.mxu0 %v719
    %1062 = vmatpush.bf16.msra.mxu0 %v717
    %1063 = vmatpush.bf16.msra.mxu0 %v715
    %1064 = vmatpush.bf16.msra.mxu0 %v713
    %1065 = vmatpush.bf16.msra.mxu0 %v711
    %1066 = vmatpush.bf16.msra.mxu0 %v709
    %1067 = vmatpush.bf16.msra.mxu0 %v707
    %1068 = vmatmul.bf16.gmra.mxu0 %v75
    %v1069 = vpop.f32.mrf.mxu0
    %v1070 = vadd.f32 %v1056, %v1069
    %v1071 = vpop.f32.mrf.mxu0
    %v1072 = vadd.f32 %v1058, %v1071
    %1073 = vdwg.mxu0
    %v1074 = vmax.f32 %v958, 0.0
    %v1075 = vmax.f32 %v1070, 0.0
    %v1076 = vmax.f32 %v960, 0.0
    %v1077 = vmax.f32 %v1072, 0.0
    %v1078 = vpack.c.bf16 %v1076, %v1074
    %v1079 = vpack.c.bf16 %v1077, %v1075
    %v1080 = vld [vmem:[%s4] sm:$0xf]
    %v1081 = vld [vmem:[%s4 + $0x4] sm:$0xf]
    %v1082 = vld [vmem:[%s4 + $0x8] sm:$0xf]
    %v1083 = vld [vmem:[%s4 + $0xc] sm:$0xf]
    %v1084 = vld [vmem:[%s4 + $0x10] sm:$0xf]
    %v1085 = vld [vmem:[%s4 + $0x14] sm:$0xf]
    %v1086 = vld [vmem:[%s4 + $0x18] sm:$0xf]
    %v1087 = vld [vmem:[%s4 + $0x1c] sm:$0xf]
    %v1088 = vld [vmem:[%s4 + $0x20] sm:$0xf]
    %v1089 = vld [vmem:[%s4 + $0x24] sm:$0xf]
    %v1090 = vld [vmem:[%s4 + $0x28] sm:$0xf]
    %v1091 = vld [vmem:[%s4 + $0x2c] sm:$0xf]
    %v1092 = vld [vmem:[%s4 + $0x30] sm:$0xf]
    %v1093 = vld [vmem:[%s4 + $0x34] sm:$0xf]
    %v1094 = vld [vmem:[%s4 + $0x38] sm:$0xf]
    %v1095 = vld [vmem:[%s4 + $0x3c] sm:$0xf]
    %v1096 = vld [vmem:[%s4 + $0x40] sm:$0xf]
    %v1097 = vld [vmem:[%s4 + $0x44] sm:$0xf]
    %v1098 = vld [vmem:[%s4 + $0x48] sm:$0xf]
    %v1099 = vld [vmem:[%s4 + $0x4c] sm:$0xf]
    %v1100 = vld [vmem:[%s4 + $0x50] sm:$0xf]
    %v1101 = vld [vmem:[%s4 + $0x54] sm:$0xf]
    %v1102 = vld [vmem:[%s4 + $0x58] sm:$0xf]
    %v1103 = vld [vmem:[%s4 + $0x5c] sm:$0xf]
    %v1104 = vld [vmem:[%s4 + $0x60] sm:$0xf]
    %v1105 = vld [vmem:[%s4 + $0x64] sm:$0xf]
    %v1106 = vld [vmem:[%s4 + $0x68] sm:$0xf]
    %v1107 = vld [vmem:[%s4 + $0x6c] sm:$0xf]
    %v1108 = vld [vmem:[%s4 + $0x70] sm:$0xf]
    %v1109 = vld [vmem:[%s4 + $0x74] sm:$0xf]
    %v1110 = vld [vmem:[%s4 + $0x78] sm:$0xf]
    %v1111 = vld [vmem:[%s4 + $0x7c] sm:$0xf]
    %v1112 = vld [vmem:[%s5] sm:$0x1]
    %v1114 = vperm.slane %v1112, 0
    %v1148 = vunpack.c.l.b16 %v1080
    %v1149 = vunpack.c.l.b16 %v1081
    %v1150 = vunpack.c.l.b16 %v1082
    %v1151 = vunpack.c.l.b16 %v1083
    %v1152 = vunpack.c.l.b16 %v1084
    %v1153 = vunpack.c.l.b16 %v1085
    %v1154 = vunpack.c.l.b16 %v1086
    %v1155 = vunpack.c.l.b16 %v1087
    %v1156 = vunpack.c.l.b16 %v1088
    %v1157 = vunpack.c.l.b16 %v1089
    %v1158 = vunpack.c.l.b16 %v1090
    %v1159 = vunpack.c.l.b16 %v1091
    %v1160 = vunpack.c.l.b16 %v1092
    %v1161 = vunpack.c.l.b16 %v1093
    %v1162 = vunpack.c.l.b16 %v1094
    %v1163 = vunpack.c.l.b16 %v1095
    %v1164 = vunpack.c.l.b16 %v1096
    %v1165 = vunpack.c.l.b16 %v1097
    %v1166 = vunpack.c.l.b16 %v1098
    %v1167 = vunpack.c.l.b16 %v1099
    %v1168 = vunpack.c.l.b16 %v1100
    %v1169 = vunpack.c.l.b16 %v1101
    %v1170 = vunpack.c.l.b16 %v1102
    %v1171 = vunpack.c.l.b16 %v1103
    %v1172 = vunpack.c.l.b16 %v1104
    %v1173 = vunpack.c.l.b16 %v1105
    %v1174 = vunpack.c.l.b16 %v1106
    %v1175 = vunpack.c.l.b16 %v1107
    %v1176 = vunpack.c.l.b16 %v1108
    %v1177 = vunpack.c.l.b16 %v1109
    %v1178 = vunpack.c.l.b16 %v1110
    %v1179 = vunpack.c.l.b16 %v1111
    %v1180 = vpack.c.b16 %v1149, %v1148
    %v1181 = vpack.c.b16 %v1151, %v1150
    %v1182 = vpack.c.b16 %v1153, %v1152
    %v1183 = vpack.c.b16 %v1155, %v1154
    %v1184 = vpack.c.b16 %v1157, %v1156
    %v1185 = vpack.c.b16 %v1159, %v1158
    %v1186 = vpack.c.b16 %v1161, %v1160
    %v1187 = vpack.c.b16 %v1163, %v1162
    %v1188 = vpack.c.b16 %v1165, %v1164
    %v1189 = vpack.c.b16 %v1167, %v1166
    %v1190 = vpack.c.b16 %v1169, %v1168
    %v1191 = vpack.c.b16 %v1171, %v1170
    %v1192 = vpack.c.b16 %v1173, %v1172
    %v1193 = vpack.c.b16 %v1175, %v1174
    %v1194 = vpack.c.b16 %v1177, %v1176
    %v1195 = vpack.c.b16 %v1179, %v1178
    %1212 = vmatpush.bf16.msra.mxu0 %v1187
    %1213 = vmatpush.bf16.msra.mxu0 %v1186
    %1214 = vmatpush.bf16.msra.mxu0 %v1185
    %1215 = vmatpush.bf16.msra.mxu0 %v1184
    %1216 = vmatpush.bf16.msra.mxu0 %v1183
    %1217 = vmatpush.bf16.msra.mxu0 %v1182
    %1218 = vmatpush.bf16.msra.mxu0 %v1181
    %1219 = vmatpush.bf16.msra.mxu0 %v1180
    %1220 = vmatmul.bf16.gmra.mxu0 %v1078
    %v1221 = vpop.f32.mrf.mxu0
    %v1222 = vadd.f32 %v1114, %v1221
    %v1223 = vpop.f32.mrf.mxu0
    %v1224 = vadd.f32 %v1114, %v1223
    %1225 = vdwg.mxu0
    %1226 = vmatpush.bf16.msra.mxu0 %v1195
    %1227 = vmatpush.bf16.msra.mxu0 %v1194
    %1228 = vmatpush.bf16.msra.mxu0 %v1193
    %1229 = vmatpush.bf16.msra.mxu0 %v1192
    %1230 = vmatpush.bf16.msra.mxu0 %v1191
    %1231 = vmatpush.bf16.msra.mxu0 %v1190
    %1232 = vmatpush.bf16.msra.mxu0 %v1189
    %1233 = vmatpush.bf16.msra.mxu0 %v1188
    %1234 = vmatmul.bf16.gmra.mxu0 %v1079
    %v1235 = vpop.f32.mrf.mxu0
    %v1236 = vadd.f32 %v1222, %v1235
    %v1237 = vpop.f32.mrf.mxu0
    %v1238 = vadd.f32 %v1224, %v1237
    %1239 = vdwg.mxu0
    %vm1240 = vcmask 523264
    %v1241 = vsel %vm1240, %v1236, 0.0
    %1242 = vadd.xlane.f32.xlu0 %v1241
    %v1243 = vpop.xlane.xlu0 %1242
    %v1244 = vsel %vm1240, %v1238, 0.0
    %1245 = vadd.xlane.f32.xlu0 %v1244
    %v1246 = vpop.xlane.xlu0 %1245
    %v1247 = vrcp.pop 64.0
    %v1248 = vmul.f32 64.0, %v1247
    %v1249 = vsub.f32 1.0, %v1248
    %v1250 = vmul.f32 %v1247, %v1249
    %v1251 = vadd.f32 %v1247, %v1250
    %vm1252 = vweird.f32 %v1247
    %v1253 = vsel %vm1252, %v1247, %v1251
    %v1254 = vmul.f32 %v1243, %v1253
    %v1255 = vmul.f32 %v1246, %v1253
    %v1256 = vsub.f32 %v1236, %v1254
    %v1257 = vsub.f32 %v1238, %v1255
    %v1258 = vmul.f32 %v1256, %v1256
    %v1259 = vmul.f32 %v1257, %v1257
    %v1260 = vsel %vm1240, %v1258, 0.0
    %1261 = vadd.xlane.f32.xlu0 %v1260
    %v1262 = vpop.xlane.xlu0 %1261
    %v1263 = vsel %vm1240, %v1259, 0.0
    %1264 = vadd.xlane.f32.xlu0 %v1263
    %v1265 = vpop.xlane.xlu0 %1264
    %v1266 = vmul.f32 %v1262, %v1253
    %v1267 = vmul.f32 %v1265, %v1253
    %v1268 = vadd.f32 %v1266, 1e-05
    %v1269 = vadd.f32 %v1267, 1e-05
    %v1270 = vrsqrt.pop %v1268
    %v1271 = vmul.f32 %v1270, %v1268
    %v1272 = vmul.f32 %v1271, %v1270
    %v1273 = vmul.f32 0.5, %v1272
    %v1274 = vsub.f32 1.5, %v1273
    %v1275 = vmul.f32 %v1270, %v1274
    %vm1276 = vweird.f32 %v1268
    %vm1277 = vweird.f32 %v1270
    %vm1278 = vmor %vm1276, %vm1277
    %v1279 = vsel %vm1278, %v1270, %v1275
    %v1280 = vrsqrt.pop %v1269
    %v1281 = vmul.f32 %v1280, %v1269
    %v1282 = vmul.f32 %v1281, %v1280
    %v1283 = vmul.f32 0.5, %v1282
    %v1284 = vsub.f32 1.5, %v1283
    %v1285 = vmul.f32 %v1280, %v1284
    %vm1286 = vweird.f32 %v1269
    %vm1287 = vweird.f32 %v1280
    %vm1288 = vmor %vm1286, %vm1287
    %v1289 = vsel %vm1288, %v1280, %v1285
    %v1290 = vmul.f32 %v1256, %v1279
    %v1291 = vmul.f32 %v1257, %v1289
    %v1292 = vld [vmem:[%s6] sm:$0x1]
    %v1294 = vperm.slane %v1292, 0
    %v1296 = vmul.f32 %v1290, %v1294
    %v1297 = vmul.f32 %v1291, %v1294
    %v1298 = vld [vmem:[%s7] sm:$0x1]
    %v1300 = vperm.slane %v1298, 0
    %v1302 = vadd.f32 %v1296, %v1300
    %v1303 = vadd.f32 %v1297, %v1300
    %v1304 = vmax.f32 %v1302, 0.0
    %v1305 = vmax.f32 %v1303, 0.0
    %v1306 = vpack.c.bf16 %v1305, %v1304
    %v1307 = vld [vmem:[%s8] sm:$0xf]
    %v1308 = vld [vmem:[%s8 + $0x4] sm:$0xf]
    %v1309 = vld [vmem:[%s8 + $0x8] sm:$0xf]
    %v1310 = vld [vmem:[%s8 + $0xc] sm:$0xf]
    %v1311 = vld [vmem:[%s8 + $0x10] sm:$0xf]
    %v1312 = vld [vmem:[%s8 + $0x14] sm:$0xf]
    %v1313 = vld [vmem:[%s8 + $0x18] sm:$0xf]
    %v1314 = vld [vmem:[%s8 + $0x1c] sm:$0xf]
    %v1315 = vld [vmem:[%s9] sm:$0x1]
    %v1317 = vperm.slane %v1315, 0
    %v1327 = vunpack.c.l.b16 %v1307
    %v1328 = vunpack.c.l.b16 %v1308
    %v1329 = vunpack.c.l.b16 %v1309
    %v1330 = vunpack.c.l.b16 %v1310
    %v1331 = vunpack.c.l.b16 %v1311
    %v1332 = vunpack.c.l.b16 %v1312
    %v1333 = vunpack.c.l.b16 %v1313
    %v1334 = vunpack.c.l.b16 %v1314
    %v1335 = vpack.c.b16 %v1328, %v1327
    %v1336 = vpack.c.b16 %v1330, %v1329
    %v1337 = vpack.c.b16 %v1332, %v1331
    %v1338 = vpack.c.b16 %v1334, %v1333
    %v1344 = vsel %vm1240, %v1306, 0
    %1346 = vmatpush.bf16.msra.mxu0 0
    %1347 = vmatpush.bf16.msra.mxu0 0
    %1348 = vmatpush.bf16.msra.mxu0 0
    %1349 = vmatpush.bf16.msra.mxu0 0
    %1350 = vmatpush.bf16.msra.mxu0 %v1338
    %1351 = vmatpush.bf16.msra.mxu0 %v1337
    %1352 = vmatpush.bf16.msra.mxu0 %v1336
    %1353 = vmatpush.bf16.msra.mxu0 %v1335
    %1354 = vmatmul.bf16.gmra.mxu0 %v1344
    %v1355 = vpop.f32.mrf.mxu0
    %v1356 = vadd.f32 %v1317, %v1355
    %v1357 = vpop.f32.mrf.mxu0
    %v1358 = vadd.f32 %v1317, %v1357
    %1359 = vdwg.mxu0
    %1360 = vst [vmem:[#allocation7] sm:$0xff] %v1356
    %1361 = vst [vmem:[#allocation7 + $0x8] sm:$0xff] %v1358
    // Predicated region
    $region42: #{tpu_custom_call.1} parent=1 // pred_check
      _
    $region43: #{tpu_custom_call.1} parent=1 // pred_check_branch
      %1363 = sbr.rel (0) target = $region45
    $region44: #{tpu_custom_call.1} parent=1 // pred_region
      %1365 = vsyncadd [#allocation6], 0
      %s1366 = sshll.u32 [#allocation7], 4
      %s1367 = int_to_ptr.vmem [resolvable:$true] %s1366
      %s1368 = sshll.u32 %s10, 4
      %s1369 = int_to_ptr.hbm [resolvable:$true] %s1368
      %1374 = dma.vmem_to_hbm [thread:$0]  %s1367, 256, %s1369, [#allocation6], 128, 128, 8
    $region45: #{tpu_custom_call.1} parent=1 // pred_fallthru
      _
    // Predicated region
    $region46: #{tpu_custom_call.1} parent=1 // pred_check
      _
    $region47: #{tpu_custom_call.1} parent=1 // pred_check_branch
      %1376 = sbr.rel (0) target = $region49
    $region48: #{tpu_custom_call.1} parent=1 // pred_region
      %1378 = dma.done [#allocation6], 256
    $region49: #{tpu_custom_call.1} parent=1 // pred_fallthru
      _
    %1379 = vsyncpa [#allocation5], 1
    %1380 = vsyncpa [#allocation6], 1

</llo_original>
